<compile_context>
chip_gen: v5e
topology: v5e:2x2
jax: 0.10.0
libtpu: 0.0.40
codegen_flags: <defaults>
</compile_context>

<pallas_src>
import jax
import jax.numpy as jnp
import numpy as np
from jax.experimental import pallas as pl
from jax.experimental.pallas import tpu as pltpu

_LANE = 128
_TM_MAX = 1024  # lane-tile cap: double-buffered bf16 x-tile + f32 out-tile stay well
                # inside every chip's scoped-VMEM default (v5e 16 MiB ... v7x 64 MiB).


def _round_up(x, m):
    return (x + m - 1) // m * m


def _conv_matmul_relu_kernel(x_ref, w_ref, o_ref):
    # x_ref: (Kp, TM)  transposed im2col columns (+ ones row for bias), bf16
    # w_ref: (Cp, Kp)  folded conv weights (+ bias column), bf16, resident
    # o_ref: (Cp, TM)  lane-dense output tile, f32 (unmasked stores)
    acc = jnp.dot(w_ref[...], x_ref[...], preferred_element_type=jnp.float32)
    o_ref[...] = jnp.maximum(acc, 0.0).astype(o_ref.dtype)


def basic_conv_forward(x_nchw, weight_oihw, bias, *, padding=1):
    """Forward of BasicConv: Conv2d(stride=1, padding=1, bias=True) + ReLU.

    x_nchw:      (N, Cin, H, W)      float32
    weight_oihw: (Cout, Cin, KH, KW) float32 (PyTorch layout)
    bias:        (Cout,)             float32
    returns:     (N, Cout, H_out, W_out) float32
    """
    N, Cin, H, W = x_nchw.shape
    Cout, _, KH, KW = weight_oihw.shape

    # ---- XLA glue: NCHW -> NHWC (cast to bf16 early), spatial zero-pad ----
    x_nhwc = jnp.transpose(x_nchw, (0, 2, 3, 1)).astype(jnp.bfloat16)
    x_sp = jnp.pad(x_nhwc, ((0, 0), (padding, padding), (padding, padding), (0, 0)))
    Hp, Wp = H + 2 * padding, W + 2 * padding
    Ho, Wo = Hp - KH + 1, Wp - KW + 1  # stride = 1

    M = N * Ho * Wo
    K = KH * KW * Cin

    # K dim = taps (kh, kw, cin) + 1 ones row (bias), padded to a multiple of 16
    # (bf16 sublane packing). Cout padded to a sublane multiple of 8.
    Kp = _round_up(K + 1, 16)
    Cp = _round_up(Cout, 8)

    # Fixed lane tile (multiple of 128); grid over M tiles.
    TM = min(_TM_MAX, _round_up(M, _LANE))
    Mp = _round_up(M, TM)
    grid = Mp // TM

    # Transposed im2col slab X(Kp, M): row ((kh*KW + kw)*Cin + c),
    # column (n*Ho*Wo + ho*Wo + wo); bias ones row at row K; zero rows after.
    taps = jnp.stack(
        [x_sp[:, kh:kh + Ho, kw:kw + Wo, :] for kh in range(KH) for kw in range(KW)],
        axis=0)                                               # (KH*KW, N, Ho, Wo, Cin)
    x_taps = jnp.moveaxis(taps, -1, 1).reshape(K, M)          # (K, M) bf16
    x_t = jnp.concatenate(
        [x_taps,
         jnp.ones((1, M), jnp.bfloat16),                      # ones row -> bias
         jnp.zeros((Kp - K - 1, M), jnp.bfloat16)],
        axis=0)                                               # (Kp, M)
    if Mp != M:
        x_t = jnp.pad(x_t, ((0, 0), (0, Mp - M)))

    # Weights W(Cp, Kp): matching (kh, kw, cin) column order, bias folded as column K.
    w_mat = jnp.transpose(weight_oihw, (0, 2, 3, 1)).reshape(Cout, K)
    w_t = jnp.concatenate(
        [w_mat, bias.reshape(Cout, 1), jnp.zeros((Cout, Kp - K - 1), w_mat.dtype)],
        axis=1)
    if Cp != Cout:
        w_t = jnp.pad(w_t, ((0, Cp - Cout), (0, 0)))
    w_t = w_t.astype(jnp.bfloat16)

    out_t = pl.pallas_call(
        _conv_matmul_relu_kernel,
        out_shape=jax.ShapeDtypeStruct((Cp, Mp), jnp.float32),
        grid_spec=pltpu.PrefetchScalarGridSpec(
            num_scalar_prefetch=0,
            grid=(grid,),
            in_specs=[
                pl.BlockSpec((Kp, TM), lambda i: (0, i)),     # im2col tile (lane-dense)
                pl.BlockSpec((Cp, Kp), lambda i: (0, 0)),     # resident weights+bias
            ],
            out_specs=pl.BlockSpec((Cp, TM), lambda i: (0, i)),
        ),
        # "parallel" lets the M tiles shard across TensorCores on dual-TC chips (v7x);
        # on single-TC v5e/v6e it is a plain sequential loop.
        compiler_params=pltpu.CompilerParams(
            dimension_semantics=("parallel",)),
    )(x_t, w_t)

    # ---- strip padding, back to NCHW ----
    out = out_t[:Cout, :M].reshape(Cout, N, Ho, Wo)
    return jnp.transpose(out, (1, 0, 2, 3))


if __name__ == "__main__":
    # Module config: BasicConv(in_channels=4, out_channels=8, filter_size=3)
    N, Cin, H, W = 2, 4, 16, 16
    Cout, Ksz = 8, 3

    key = jax.random.PRNGKey(0)
    kx, kw, kb = jax.random.split(key, 3)
    x = jax.random.normal(kx, (N, Cin, H, W), dtype=jnp.float32)
    # Deterministic param init (PyTorch-style uniform bound 1/sqrt(fan_in)).
    bound = 1.0 / np.sqrt(Cin * Ksz * Ksz)
    weight = jax.random.uniform(kw, (Cout, Cin, Ksz, Ksz), jnp.float32, -bound, bound)
    bias = jax.random.uniform(kb, (Cout,), jnp.float32, -bound, bound)

    out = jax.jit(basic_conv_forward)(x, weight, bias)
    out = jax.block_until_ready(out)

    # Reference check against XLA f32 conv + bias + relu.
    ref = jax.lax.conv_general_dilated(
        x, weight, window_strides=(1, 1), padding=((1, 1), (1, 1)),
        dimension_numbers=("NCHW", "OIHW", "NCHW"))
    ref = jnp.maximum(ref + bias.reshape(1, Cout, 1, 1), 0.0)
    assert out.shape == (N, Cout, H, W)
    # bf16 operands (f32 accumulation) -> loosened tolerance vs the f32 reference.
    np.testing.assert_allclose(np.asarray(out), np.asarray(ref), rtol=2e-2, atol=2e-2)

    print("KERNEL_OK")
</pallas_src>

<mosaic_0001>
module attributes {stable_mosaic.version = 11 : i64} {
  func.func @_conv_matmul_relu_kernel(%arg0: i32, %arg1: memref<48x512xbf16, #tpu.memory_space<vmem>>, %arg2: memref<8x48xbf16, #tpu.memory_space<vmem>>, %arg3: memref<8x512xf32, #tpu.memory_space<vmem>>) attributes {dimension_semantics = [#tpu.dimension_semantics<parallel>], iteration_bounds = array<i64: 1>, scalar_prefetch = 0 : i64, scratch_operands = 0 : i64, tpu.core_type = #tpu.core_type<tc>, window_params = [{transform_indices = @transform_0, window_bounds = array<i64: 48, 512>}, {pipeline_mode = #tpu.pipeline_mode<synchronous>, transform_indices = @transform_1, window_bounds = array<i64: 8, 48>}, {transform_indices = @transform_2, window_bounds = array<i64: 8, 512>}]} {
    %c0 = arith.constant 0 : index
    %c0_0 = arith.constant 0 : index
    %0 = vector.load %arg2[%c0, %c0_0] : memref<8x48xbf16, #tpu.memory_space<vmem>>, vector<8x48xbf16>
    %c0_1 = arith.constant 0 : index
    %c0_2 = arith.constant 0 : index
    %1 = vector.load %arg1[%c0_1, %c0_2] : memref<48x512xbf16, #tpu.memory_space<vmem>>, vector<48x512xbf16>
    %cst = arith.constant dense<0.000000e+00> : vector<8x512xf32>
    %2 = tpu.matmul %0, %1, %cst {dimension_numbers = #tpu.dot_dimension_numbers<[1], [0], [0], [1], [0, 0, 1, 1], [], []>} : vector<8x48xbf16>, vector<48x512xbf16>, vector<8x512xf32> -> vector<8x512xf32>
    %cst_3 = arith.constant 0.000000e+00 : f32
    %3 = vector.broadcast %cst_3 : f32 to vector<8x512xf32>
    %4 = arith.maximumf %2, %3 : vector<8x512xf32>
    %c0_4 = arith.constant 0 : index
    %c0_5 = arith.constant 0 : index
    %5 = vector.load %arg3[%c0_4, %c0_5] : memref<8x512xf32, #tpu.memory_space<vmem>>, vector<8x512xf32>
    tpu.vector_store %arg3[%c0_4, %c0_5], %4 {strides = array<i32>} : memref<8x512xf32, #tpu.memory_space<vmem>>, vector<8x512xf32>,
    return
  }
  func.func @transform_0(%arg0: i32) -> (i32, i32) {
    %c0_i32 = arith.constant 0 : i32
    %c0_i32_0 = arith.constant 0 : i32
    return %c0_i32, %arg0 : i32, i32
  }
  func.func @transform_1(%arg0: i32) -> (i32, i32) {
    %c0_i32 = arith.constant 0 : i32
    %c0_i32_0 = arith.constant 0 : i32
    %c0_i32_1 = arith.constant 0 : i32
    return %c0_i32, %c0_i32_0 : i32, i32
  }
  func.func @transform_2(%arg0: i32) -> (i32, i32) {
    %c0_i32 = arith.constant 0 : i32
    %c0_i32_0 = arith.constant 0 : i32
    return %c0_i32, %arg0 : i32, i32
  }
}

</mosaic_0001>

<llo_original>
// kernel: basic_conv_forward.1
$region0: #{basic_conv_forward.1}
  #allocation0 [shape = 'u32[]', space=smem, size = 0x4, offset = 0x4, fixed_abs, tag = 'smem constant byte address 0x4 - core index']
  #allocation1 [shape = 'u32[72,128]{1,0:T(1,128)}', space=vmem, size = 0x9000, scoped, tag = 'internal scratch']
  %s0 = inlined_call_operand.vmem [shape: bf16[48,512], index: 0, kind: input, shape index: {}]
  %s1 = inlined_call_operand.vmem [shape: bf16[8,48], index: 1, kind: input, shape index: {}]
  %s2 = inlined_call_operand.vmem [shape: f32[8,512], index: 2, kind: output, shape index: {}]
  %s3 = sld [smem:[#allocation0]]
  $region18: #{basic_conv_forward.1} parent=0
    _
  %s5 = ssub.s32 1, %s3
  %s6 = scalar_select 0, %s5, %s3
  // Predicated region
  $region2: #{basic_conv_forward.1} parent=0 // pred_check
    _
  $region3: #{basic_conv_forward.1} parent=0 // pred_check_branch
    %8 = sbr.rel (0) target = $region5
  $region4: #{basic_conv_forward.1} parent=0 // pred_region
    _
  $region5: #{basic_conv_forward.1} parent=0 // pred_fallthru
    _
  // Predicated region
  $region6: #{basic_conv_forward.1} parent=0 // pred_check
    _
  $region7: #{basic_conv_forward.1} parent=0 // pred_check_branch
    %10 = sbr.rel (0) target = $region9
  $region8: #{basic_conv_forward.1} parent=0 // pred_region
    _
  $region9: #{basic_conv_forward.1} parent=0 // pred_fallthru
    _
  %v12 = vld [vmem:[%s1] sm:$0xf]
  %v13 = vld [vmem:[%s0] sm:$0xff]
  %v14 = vld [vmem:[%s0 + $0x8] sm:$0xff]
  %v15 = vld [vmem:[%s0 + $0x10] sm:$0xff]
  %v16 = vld [vmem:[%s0 + $0x18] sm:$0xff]
  %v17 = vld [vmem:[%s0 + $0x20] sm:$0xff]
  %v18 = vld [vmem:[%s0 + $0x28] sm:$0xff]
  %v19 = vld [vmem:[%s0 + $0x30] sm:$0xff]
  %v20 = vld [vmem:[%s0 + $0x38] sm:$0xff]
  %v21 = vld [vmem:[%s0 + $0x40] sm:$0xff]
  %v22 = vld [vmem:[%s0 + $0x48] sm:$0xff]
  %v23 = vld [vmem:[%s0 + $0x50] sm:$0xff]
  %v24 = vld [vmem:[%s0 + $0x58] sm:$0xff]
  %v37 = vunpack.c.l.b16 %v13
  %v38 = vunpack.c.h.b16 %v13
  %v39 = vunpack.c.l.b16 %v14
  %v40 = vunpack.c.h.b16 %v14
  %v41 = vunpack.c.l.b16 %v15
  %v42 = vunpack.c.h.b16 %v15
  %v43 = vunpack.c.l.b16 %v16
  %v44 = vunpack.c.h.b16 %v16
  %v45 = vunpack.c.l.b16 %v17
  %v46 = vunpack.c.h.b16 %v17
  %v47 = vunpack.c.l.b16 %v18
  %v48 = vunpack.c.h.b16 %v18
  %v49 = vunpack.c.l.b16 %v19
  %v50 = vunpack.c.h.b16 %v19
  %v51 = vunpack.c.l.b16 %v20
  %v52 = vunpack.c.h.b16 %v20
  %v53 = vunpack.c.l.b16 %v21
  %v54 = vunpack.c.h.b16 %v21
  %v55 = vunpack.c.l.b16 %v22
  %v56 = vunpack.c.h.b16 %v22
  %v57 = vunpack.c.l.b16 %v23
  %v58 = vunpack.c.h.b16 %v23
  %v59 = vunpack.c.l.b16 %v24
  %v60 = vunpack.c.h.b16 %v24
  %v61 = vpack.c.b16 %v41, %v37
  %v62 = vpack.c.b16 %v42, %v38
  %v63 = vpack.c.b16 %v43, %v39
  %v64 = vpack.c.b16 %v44, %v40
  %v65 = vpack.c.b16 %v49, %v45
  %v66 = vpack.c.b16 %v50, %v46
  %v67 = vpack.c.b16 %v51, %v47
  %v68 = vpack.c.b16 %v52, %v48
  %v69 = vpack.c.b16 %v57, %v53
  %v70 = vpack.c.b16 %v58, %v54
  %v71 = vpack.c.b16 %v59, %v55
  %v72 = vpack.c.b16 %v60, %v56
  %vm85 = vcmask 392192
  %v87 = vsel %vm85, %v12, 0
  %89 = vmatpush.bf16.msra.mxu0 0
  %90 = vmatpush.bf16.msra.mxu0 0
  %91 = vmatpush.bf16.msra.mxu0 0
  %92 = vmatpush.bf16.msra.mxu0 0
  %93 = vmatpush.bf16.msra.mxu0 0
  %94 = vmatpush.bf16.msra.mxu0 %v69
  %95 = vmatpush.bf16.msra.mxu0 %v65
  %96 = vmatpush.bf16.msra.mxu0 %v61
  %97 = vmatmul.bf16.gmra.mxu0 %v87
  %v98 = vpop.f32.mrf.mxu0
  %v99 = vadd.f32 0.0, %v98
  %v100 = vpop.f32.mrf.mxu0
  %101 = vdwg.mxu0
  %102 = vmatpush.bf16.msra.mxu0 0
  %103 = vmatpush.bf16.msra.mxu0 0
  %104 = vmatpush.bf16.msra.mxu0 0
  %105 = vmatpush.bf16.msra.mxu0 0
  %106 = vmatpush.bf16.msra.mxu0 0
  %107 = vmatpush.bf16.msra.mxu0 %v70
  %108 = vmatpush.bf16.msra.mxu0 %v66
  %109 = vmatpush.bf16.msra.mxu0 %v62
  %110 = vmatmul.bf16.gmra.mxu0 %v87
  %v111 = vpop.f32.mrf.mxu0
  %v112 = vadd.f32 0.0, %v111
  %v113 = vpop.f32.mrf.mxu0
  %114 = vdwg.mxu0
  %115 = vmatpush.bf16.msra.mxu0 0
  %116 = vmatpush.bf16.msra.mxu0 0
  %117 = vmatpush.bf16.msra.mxu0 0
  %118 = vmatpush.bf16.msra.mxu0 0
  %119 = vmatpush.bf16.msra.mxu0 0
  %120 = vmatpush.bf16.msra.mxu0 %v71
  %121 = vmatpush.bf16.msra.mxu0 %v67
  %122 = vmatpush.bf16.msra.mxu0 %v63
  %123 = vmatmul.bf16.gmra.mxu0 %v87
  %v124 = vpop.f32.mrf.mxu0
  %v125 = vadd.f32 0.0, %v124
  %v126 = vpop.f32.mrf.mxu0
  %127 = vdwg.mxu0
  %128 = vmatpush.bf16.msra.mxu0 0
  %129 = vmatpush.bf16.msra.mxu0 0
  %130 = vmatpush.bf16.msra.mxu0 0
  %131 = vmatpush.bf16.msra.mxu0 0
  %132 = vmatpush.bf16.msra.mxu0 0
  %133 = vmatpush.bf16.msra.mxu0 %v72
  %134 = vmatpush.bf16.msra.mxu0 %v68
  %135 = vmatpush.bf16.msra.mxu0 %v64
  %136 = vmatmul.bf16.gmra.mxu0 %v87
  %v137 = vpop.f32.mrf.mxu0
  %v138 = vadd.f32 0.0, %v137
  %v139 = vpop.f32.mrf.mxu0
  %140 = vdwg.mxu0
  %v141 = vmax.f32 %v99, 0.0
  %v142 = vmax.f32 %v112, 0.0
  %v143 = vmax.f32 %v125, 0.0
  %v144 = vmax.f32 %v138, 0.0
  %145 = vst [vmem:[%s2] sm:$0xff] %v141
  %146 = vst [vmem:[%s2 + $0x8] sm:$0xff] %v142
  %147 = vst [vmem:[%s2 + $0x10] sm:$0xff] %v143
  %148 = vst [vmem:[%s2 + $0x18] sm:$0xff] %v144
  // Predicated region
  $region10: #{basic_conv_forward.1} parent=0 // pred_check
    _
  $region11: #{basic_conv_forward.1} parent=0 // pred_check_branch
    %150 = sbr.rel (0) target = $region13
  $region12: #{basic_conv_forward.1} parent=0 // pred_region
    _
  $region13: #{basic_conv_forward.1} parent=0 // pred_fallthru
    _
  // Predicated region
  $region14: #{basic_conv_forward.1} parent=0 // pred_check
    _
  $region15: #{basic_conv_forward.1} parent=0 // pred_check_branch
    %152 = sbr.rel (0) target = $region17
  $region16: #{basic_conv_forward.1} parent=0 // pred_region
    _
  $region17: #{basic_conv_forward.1} parent=0 // pred_fallthru
    _

</llo_original>
